<compile_context>
chip_gen: v7x
topology: tpu7x:2x2x1
jax: 0.10.0
libtpu: 0.0.40
codegen_flags: <defaults>
</compile_context>

<pallas_src>
import functools

import jax
import jax.numpy as jnp
from jax.experimental import pallas as pl
from jax.experimental.pallas import tpu as pltpu

LOG_SIG_MAX = 2.0
LOG_SIG_MIN = -5.0
MEAN_MAX = 9.0
MEAN_MIN = -9.0


def _round_up(x: int, m: int) -> int:
    return ((x + m - 1) // m) * m


def _make_kernel(num_layers: int, action_pad: int):
    """Kernel for one batch tile. Weights/biases are grid-invariant VMEM blocks."""

    def kernel(*refs):
        # refs: x, w0, b0, [wh_i, wx_i, b_i] * (num_layers-1), w_head, b_head,
        #       mean_out, std_out
        it = iter(refs)
        x_ref = next(it)
        w0 = next(it)[...]
        b0 = next(it)[...]
        layer_params = []
        for _ in range(num_layers - 1):
            layer_params.append((next(it)[...], next(it)[...], next(it)[...]))
        w_head = next(it)[...]
        b_head = next(it)[...]
        mean_ref = next(it)
        std_ref = next(it)

        # Cast x to the weight/compute dtype (no-op when f32); accumulate in f32.
        x = x_ref[...].astype(w0.dtype)

        h = jnp.dot(x, w0, preferred_element_type=jnp.float32) + b0
        h = h * jax.lax.logistic(h)  # SiLU (logistic goes to the EUP slot)

        for wh, wx, b in layer_params:
            # cat([h, x], -1) @ W  ==  h @ W[:H] + x @ W[H:]   (identical math)
            z = (jnp.dot(h.astype(wh.dtype), wh, preferred_element_type=jnp.float32)
                 + jnp.dot(x, wx, preferred_element_type=jnp.float32)
                 + b)
            h = z * jax.lax.logistic(z)

        # Fused mean||log_std head: one matmul, lane-dense 128-wide halves.
        z = jnp.dot(h.astype(w_head.dtype), w_head,
                    preferred_element_type=jnp.float32) + b_head
        mean_ref[...] = jnp.clip(z[:, :action_pad], MEAN_MIN, MEAN_MAX)
        log_std = jnp.clip(z[:, action_pad:], LOG_SIG_MIN, LOG_SIG_MAX)
        std_ref[...] = jnp.exp(log_std)

    return kernel


@functools.partial(jax.jit, static_argnames=("num_layers", "action_dim", "tile_b"))
def d2rl_policy_forward(x, packed, *, num_layers: int, action_dim: int, tile_b: int = 512):
    """Run the D2RL policy forward.  `packed` comes from pack_params()."""
    B, input_dim = x.shape
    hidden_dim = packed["w0"].shape[1]
    head_width = packed["w_head"].shape[1]          # 2 * P
    action_pad = head_width // 2                    # P = round_up(action_dim, 128)

    # Batch tiling: multiple of 8 sublanes; pad B so the grid divides evenly.
    tb = _round_up(min(tile_b, _round_up(max(B, 1), 8)), 8)
    Bp = _round_up(B, tb)
    if Bp != B:
        x = jnp.pad(x, ((0, Bp - B), (0, 0)))
    grid = (Bp // tb,)

    def const_spec(arr):
        nd = arr.ndim
        return pl.BlockSpec(arr.shape, lambda i, _nd=nd: (0,) * _nd)

    args = [x, packed["w0"], packed["b0"]]
    in_specs = [
        pl.BlockSpec((tb, input_dim), lambda i: (i, 0)),
        const_spec(packed["w0"]),
        const_spec(packed["b0"]),
    ]
    for wh, wx, b in zip(packed["wh"], packed["wx"], packed["b"]):
        args += [wh, wx, b]
        in_specs += [const_spec(wh), const_spec(wx), const_spec(b)]
    args += [packed["w_head"], packed["b_head"]]
    in_specs += [const_spec(packed["w_head"]), const_spec(packed["b_head"])]

    out_specs = (
        pl.BlockSpec((tb, action_pad), lambda i: (i, 0)),
        pl.BlockSpec((tb, action_pad), lambda i: (i, 0)),
    )
    out_shape = (
        jax.ShapeDtypeStruct((Bp, action_pad), jnp.float32),
        jax.ShapeDtypeStruct((Bp, action_pad), jnp.float32),
    )

    # Explicit VMEM budget: resident weights + double-buffered x/out tiles + acts.
    weight_bytes = sum(int(a.size) * a.dtype.itemsize for a in args[1:])
    io_bytes = 2 * (tb * input_dim * x.dtype.itemsize) + 2 * 2 * (tb * action_pad * 4)
    act_bytes = 6 * tb * hidden_dim * 4
    needed = weight_bytes + io_bytes + act_bytes
    vmem_limit = int(min(max(2 * needed, 32 * 1024 * 1024), 64 * 1024 * 1024))

    flops = 2 * Bp * (input_dim * hidden_dim
                      + (num_layers - 1) * (hidden_dim + input_dim) * hidden_dim
                      + hidden_dim * head_width)
    transcendentals = Bp * (num_layers * hidden_dim + head_width)
    bytes_accessed = (weight_bytes
                      + Bp * input_dim * x.dtype.itemsize
                      + 2 * Bp * action_pad * 4)

    mean_p, std_p = pl.pallas_call(
        _make_kernel(num_layers, action_pad),
        out_shape=out_shape,
        grid=grid,
        in_specs=in_specs,
        out_specs=out_specs,
        compiler_params=pltpu.CompilerParams(
            dimension_semantics=("parallel",),
            vmem_limit_bytes=vmem_limit,
        ),
        cost_estimate=pl.CostEstimate(
            flops=flops,
            transcendentals=transcendentals,
            bytes_accessed=bytes_accessed,
        ),
    )(*args)

    return mean_p[:B, :action_dim], std_p[:B, :action_dim]


def pack_params(params, compute_dtype=jnp.bfloat16):
    """One-time packing: cast weights to compute dtype, fuse + lane-pad the head.

    Keeps biases in f32 (added to the f32 MXU accumulation).
    """
    action_dim = params["wm"].shape[1]
    pad = _round_up(action_dim, 128)

    def pad_cols(a):
        return jnp.pad(a, ((0, 0), (0, pad - a.shape[1])))

    w_head = jnp.concatenate([pad_cols(params["wm"]), pad_cols(params["ws"])], axis=1)
    b_head = jnp.concatenate([pad_cols(params["bm"]), pad_cols(params["bs"])], axis=1)

    return {
        "w0": params["w0"].astype(compute_dtype),
        "b0": params["b0"].astype(jnp.float32),
        "wh": [w.astype(compute_dtype) for w in params["wh"]],
        "wx": [w.astype(compute_dtype) for w in params["wx"]],
        "b": [b.astype(jnp.float32) for b in params["b"]],
        "w_head": w_head.astype(compute_dtype),
        "b_head": b_head.astype(jnp.float32),
    }


def init_params(key, input_dim, action_dim, num_layers, hidden_dim, init_w=0.001):
    """Synthetic parameters with shapes/ranges matching the PyTorch module's __init__.

    Trunk weights are stored transposed (in, out) and pre-split:
      wh[i] : (hidden_dim, hidden_dim)  -- rows multiplying h   (cat([h, x]) order)
      wx[i] : (input_dim,  hidden_dim)  -- rows multiplying x
    """
    keys = jax.random.split(key, 3 * num_layers + 4)
    ki = iter(keys)

    lim0 = 1.0 / jnp.sqrt(input_dim)
    w0 = jax.random.uniform(next(ki), (input_dim, hidden_dim), jnp.float32, -lim0, lim0)
    b0 = jax.random.uniform(next(ki), (1, hidden_dim), jnp.float32, -lim0, lim0)

    aux_dim = input_dim + hidden_dim
    lim = 1.0 / jnp.sqrt(aux_dim)
    wh, wx, b = [], [], []
    for _ in range(num_layers - 1):
        wh.append(jax.random.uniform(next(ki), (hidden_dim, hidden_dim),
                                     jnp.float32, -lim, lim))
        wx.append(jax.random.uniform(next(ki), (input_dim, hidden_dim),
                                     jnp.float32, -lim, lim))
        b.append(jax.random.uniform(next(ki), (1, hidden_dim), jnp.float32, -lim, lim))

    wm = jax.random.uniform(next(ki), (hidden_dim, action_dim), jnp.float32, -init_w, init_w)
    bm = jax.random.uniform(next(ki), (1, action_dim), jnp.float32, -init_w, init_w)
    ws = jax.random.uniform(next(ki), (hidden_dim, action_dim), jnp.float32, -init_w, init_w)
    bs = jax.random.uniform(next(ki), (1, action_dim), jnp.float32, -init_w, init_w)

    return {"w0": w0, "b0": b0, "wh": wh, "wx": wx, "b": b,
            "wm": wm, "bm": bm, "ws": ws, "bs": bs}


def _reference_forward(x, params, num_layers):
    """Pure-JAX reference matching the PyTorch forward literally (with concat)."""
    h = jax.nn.silu(x @ params["w0"] + params["b0"])
    for i in range(num_layers - 1):
        W = jnp.concatenate([params["wh"][i], params["wx"][i]], axis=0)
        h = jnp.concatenate([h, x], axis=-1)
        h = jax.nn.silu(h @ W + params["b"][i])
    mean = jnp.clip(h @ params["wm"] + params["bm"], MEAN_MIN, MEAN_MAX)
    log_std = jnp.clip(h @ params["ws"] + params["bs"], LOG_SIG_MIN, LOG_SIG_MAX)
    return mean, jnp.exp(log_std)


if __name__ == "__main__":
    # Small shapes consistent with the module:
    # D2RLPolicy(input_dim=16, action_dim=8, num_layers=2, hidden_dim=32),
    # discrete_gripper=False.
    batch, input_dim, action_dim, num_layers, hidden_dim = 4, 16, 8, 2, 32

    key = jax.random.PRNGKey(0)
    k_x, k_p = jax.random.split(key)
    x = jax.random.normal(k_x, (batch, input_dim), jnp.float32)
    params = init_params(k_p, input_dim, action_dim, num_layers, hidden_dim)

    # f32 weights: exact-match check against the literal concat reference.
    packed_f32 = pack_params(params, compute_dtype=jnp.float32)
    mean, std = d2rl_policy_forward(x, packed_f32,
                                    num_layers=num_layers, action_dim=action_dim)
    jax.block_until_ready((mean, std))

    ref_mean, ref_std = _reference_forward(x, params, num_layers)
    assert mean.shape == (batch, action_dim) and std.shape == (batch, action_dim)
    assert jnp.allclose(mean, ref_mean, atol=1e-5, rtol=1e-5)
    assert jnp.allclose(std, ref_std, atol=1e-5, rtol=1e-5)

    # bf16-weight fast path (halves resident-weight VMEM/HBM footprint); small
    # numeric drift vs the f32 reference is expected and acceptable for RL.
    packed_bf16 = pack_params(params, compute_dtype=jnp.bfloat16)
    mean_bf16, std_bf16 = d2rl_policy_forward(x, packed_bf16,
                                              num_layers=num_layers,
                                              action_dim=action_dim)
    jax.block_until_ready((mean_bf16, std_bf16))

    print("KERNEL_OK")
</pallas_src>

<mosaic_0001>
module attributes {stable_mosaic.version = 11 : i64} {
  func.func @kernel(%arg0: i32, %arg1: memref<8x16xf32, #tpu.memory_space<vmem>>, %arg2: memref<16x32xf32, #tpu.memory_space<vmem>>, %arg3: memref<1x32xf32, #tpu.memory_space<vmem>>, %arg4: memref<32x32xf32, #tpu.memory_space<vmem>>, %arg5: memref<16x32xf32, #tpu.memory_space<vmem>>, %arg6: memref<1x32xf32, #tpu.memory_space<vmem>>, %arg7: memref<32x256xf32, #tpu.memory_space<vmem>>, %arg8: memref<1x256xf32, #tpu.memory_space<vmem>>, %arg9: memref<8x128xf32, #tpu.memory_space<vmem>>, %arg10: memref<8x128xf32, #tpu.memory_space<vmem>>) attributes {dimension_semantics = [#tpu.dimension_semantics<parallel>], iteration_bounds = array<i64: 1>, scalar_prefetch = 0 : i64, scratch_operands = 0 : i64, tpu.core_type = #tpu.core_type<tc>, window_params = [{transform_indices = @transform_0, window_bounds = array<i64: 8, 16>}, {pipeline_mode = #tpu.pipeline_mode<synchronous>, transform_indices = @transform_1, window_bounds = array<i64: 16, 32>}, {pipeline_mode = #tpu.pipeline_mode<synchronous>, transform_indices = @transform_2, window_bounds = array<i64: 1, 32>}, {pipeline_mode = #tpu.pipeline_mode<synchronous>, transform_indices = @transform_3, window_bounds = array<i64: 32, 32>}, {pipeline_mode = #tpu.pipeline_mode<synchronous>, transform_indices = @transform_4, window_bounds = array<i64: 16, 32>}, {pipeline_mode = #tpu.pipeline_mode<synchronous>, transform_indices = @transform_5, window_bounds = array<i64: 1, 32>}, {pipeline_mode = #tpu.pipeline_mode<synchronous>, transform_indices = @transform_6, window_bounds = array<i64: 32, 256>}, {pipeline_mode = #tpu.pipeline_mode<synchronous>, transform_indices = @transform_7, window_bounds = array<i64: 1, 256>}, {transform_indices = @transform_8, window_bounds = array<i64: 8, 128>}, {transform_indices = @transform_9, window_bounds = array<i64: 8, 128>}]} {
    %c0 = arith.constant 0 : index
    %c0_0 = arith.constant 0 : index
    %0 = vector.load %arg2[%c0, %c0_0] : memref<16x32xf32, #tpu.memory_space<vmem>>, vector<16x32xf32>
    %c0_1 = arith.constant 0 : index
    %c0_2 = arith.constant 0 : index
    %1 = vector.load %arg3[%c0_1, %c0_2] : memref<1x32xf32, #tpu.memory_space<vmem>>, vector<1x32xf32>
    %c0_3 = arith.constant 0 : index
    %c0_4 = arith.constant 0 : index
    %2 = vector.load %arg4[%c0_3, %c0_4] : memref<32x32xf32, #tpu.memory_space<vmem>>, vector<32x32xf32>
    %c0_5 = arith.constant 0 : index
    %c0_6 = arith.constant 0 : index
    %3 = vector.load %arg5[%c0_5, %c0_6] : memref<16x32xf32, #tpu.memory_space<vmem>>, vector<16x32xf32>
    %c0_7 = arith.constant 0 : index
    %c0_8 = arith.constant 0 : index
    %4 = vector.load %arg6[%c0_7, %c0_8] : memref<1x32xf32, #tpu.memory_space<vmem>>, vector<1x32xf32>
    %c0_9 = arith.constant 0 : index
    %c0_10 = arith.constant 0 : index
    %5 = vector.load %arg7[%c0_9, %c0_10] : memref<32x256xf32, #tpu.memory_space<vmem>>, vector<32x256xf32>
    %c0_11 = arith.constant 0 : index
    %c0_12 = arith.constant 0 : index
    %6 = vector.load %arg8[%c0_11, %c0_12] : memref<1x256xf32, #tpu.memory_space<vmem>>, vector<1x256xf32>
    %c0_13 = arith.constant 0 : index
    %c0_14 = arith.constant 0 : index
    %7 = vector.load %arg1[%c0_13, %c0_14] : memref<8x16xf32, #tpu.memory_space<vmem>>, vector<8x16xf32>
    %cst = arith.constant dense<0.000000e+00> : vector<8x32xf32>
    %8 = tpu.matmul %7, %0, %cst {dimension_numbers = #tpu.dot_dimension_numbers<[1], [0], [0], [1], [0, 0, 1, 1], [], []>} : vector<8x16xf32>, vector<16x32xf32>, vector<8x32xf32> -> vector<8x32xf32>
    %9 = vector.broadcast %1 : vector<1x32xf32> to vector<8x32xf32>
    %10 = arith.addf %8, %9 : vector<8x32xf32>
    %11 = arith.negf %10 : vector<8x32xf32>
    %12 = math.exp %11 : vector<8x32xf32>
    %cst_15 = arith.constant 1.000000e+00 : f32
    %13 = vector.broadcast %cst_15 : f32 to vector<8x32xf32>
    %14 = arith.addf %13, %12 : vector<8x32xf32>
    %15 = arith.divf %13, %14 : vector<8x32xf32>
    %16 = arith.mulf %10, %15 : vector<8x32xf32>
    %cst_16 = arith.constant dense<0.000000e+00> : vector<8x32xf32>
    %17 = tpu.matmul %16, %2, %cst_16 {dimension_numbers = #tpu.dot_dimension_numbers<[1], [0], [0], [1], [0, 0, 1, 1], [], []>} : vector<8x32xf32>, vector<32x32xf32>, vector<8x32xf32> -> vector<8x32xf32>
    %cst_17 = arith.constant dense<0.000000e+00> : vector<8x32xf32>
    %18 = tpu.matmul %7, %3, %cst_17 {dimension_numbers = #tpu.dot_dimension_numbers<[1], [0], [0], [1], [0, 0, 1, 1], [], []>} : vector<8x16xf32>, vector<16x32xf32>, vector<8x32xf32> -> vector<8x32xf32>
    %19 = arith.addf %17, %18 : vector<8x32xf32>
    %20 = vector.broadcast %4 : vector<1x32xf32> to vector<8x32xf32>
    %21 = arith.addf %19, %20 : vector<8x32xf32>
    %22 = arith.negf %21 : vector<8x32xf32>
    %23 = math.exp %22 : vector<8x32xf32>
    %cst_18 = arith.constant 1.000000e+00 : f32
    %24 = vector.broadcast %cst_18 : f32 to vector<8x32xf32>
    %25 = arith.addf %24, %23 : vector<8x32xf32>
    %26 = arith.divf %24, %25 : vector<8x32xf32>
    %27 = arith.mulf %21, %26 : vector<8x32xf32>
    %cst_19 = arith.constant dense<0.000000e+00> : vector<8x256xf32>
    %28 = tpu.matmul %27, %5, %cst_19 {dimension_numbers = #tpu.dot_dimension_numbers<[1], [0], [0], [1], [0, 0, 1, 1], [], []>} : vector<8x32xf32>, vector<32x256xf32>, vector<8x256xf32> -> vector<8x256xf32>
    %29 = vector.broadcast %6 : vector<1x256xf32> to vector<8x256xf32>
    %30 = arith.addf %28, %29 : vector<8x256xf32>
    %31 = vector.extract_strided_slice %30 {offsets = [0, 0], sizes = [8, 128], strides = [1, 1]} : vector<8x256xf32> to vector<8x128xf32>
    %cst_20 = arith.constant -9.000000e+00 : f32
    %cst_21 = arith.constant 9.000000e+00 : f32
    %32 = vector.broadcast %cst_20 : f32 to vector<8x128xf32>
    %33 = arith.maximumf %32, %31 : vector<8x128xf32>
    %34 = vector.broadcast %cst_21 : f32 to vector<8x128xf32>
    %35 = arith.minimumf %34, %33 : vector<8x128xf32>
    %c0_22 = arith.constant 0 : index
    %c0_23 = arith.constant 0 : index
    %36 = vector.load %arg9[%c0_22, %c0_23] : memref<8x128xf32, #tpu.memory_space<vmem>>, vector<8x128xf32>
    tpu.vector_store %arg9[%c0_22, %c0_23], %35 {strides = array<i32>} : memref<8x128xf32, #tpu.memory_space<vmem>>, vector<8x128xf32>,
    %37 = vector.extract_strided_slice %30 {offsets = [0, 128], sizes = [8, 128], strides = [1, 1]} : vector<8x256xf32> to vector<8x128xf32>
    %cst_24 = arith.constant -5.000000e+00 : f32
    %cst_25 = arith.constant 2.000000e+00 : f32
    %38 = vector.broadcast %cst_24 : f32 to vector<8x128xf32>
    %39 = arith.maximumf %38, %37 : vector<8x128xf32>
    %40 = vector.broadcast %cst_25 : f32 to vector<8x128xf32>
    %41 = arith.minimumf %40, %39 : vector<8x128xf32>
    %42 = math.exp %41 : vector<8x128xf32>
    %c0_26 = arith.constant 0 : index
    %c0_27 = arith.constant 0 : index
    %43 = vector.load %arg10[%c0_26, %c0_27] : memref<8x128xf32, #tpu.memory_space<vmem>>, vector<8x128xf32>
    tpu.vector_store %arg10[%c0_26, %c0_27], %42 {strides = array<i32>} : memref<8x128xf32, #tpu.memory_space<vmem>>, vector<8x128xf32>,
    return
  }
  func.func @transform_0(%arg0: i32) -> (i32, i32) {
    %c0_i32 = arith.constant 0 : i32
    %c0_i32_0 = arith.constant 0 : i32
    return %arg0, %c0_i32 : i32, i32
  }
  func.func @transform_1(%arg0: i32) -> (i32, i32) {
    %c0_i32 = arith.constant 0 : i32
    %c0_i32_0 = arith.constant 0 : i32
    %c0_i32_1 = arith.constant 0 : i32
    return %c0_i32, %c0_i32_0 : i32, i32
  }
  func.func @transform_2(%arg0: i32) -> (i32, i32) {
    %c0_i32 = arith.constant 0 : i32
    %c0_i32_0 = arith.constant 0 : i32
    %c0_i32_1 = arith.constant 0 : i32
    return %c0_i32, %c0_i32_0 : i32, i32
  }
  func.func @transform_3(%arg0: i32) -> (i32, i32) {
    %c0_i32 = arith.constant 0 : i32
    %c0_i32_0 = arith.constant 0 : i32
    %c0_i32_1 = arith.constant 0 : i32
    return %c0_i32, %c0_i32_0 : i32, i32
  }
  func.func @transform_4(%arg0: i32) -> (i32, i32) {
    %c0_i32 = arith.constant 0 : i32
    %c0_i32_0 = arith.constant 0 : i32
    %c0_i32_1 = arith.constant 0 : i32
    return %c0_i32, %c0_i32_0 : i32, i32
  }
  func.func @transform_5(%arg0: i32) -> (i32, i32) {
    %c0_i32 = arith.constant 0 : i32
    %c0_i32_0 = arith.constant 0 : i32
    %c0_i32_1 = arith.constant 0 : i32
    return %c0_i32, %c0_i32_0 : i32, i32
  }
  func.func @transform_6(%arg0: i32) -> (i32, i32) {
    %c0_i32 = arith.constant 0 : i32
    %c0_i32_0 = arith.constant 0 : i32
    %c0_i32_1 = arith.constant 0 : i32
    return %c0_i32, %c0_i32_0 : i32, i32
  }
  func.func @transform_7(%arg0: i32) -> (i32, i32) {
    %c0_i32 = arith.constant 0 : i32
    %c0_i32_0 = arith.constant 0 : i32
    %c0_i32_1 = arith.constant 0 : i32
    return %c0_i32, %c0_i32_0 : i32, i32
  }
  func.func @transform_8(%arg0: i32) -> (i32, i32) {
    %c0_i32 = arith.constant 0 : i32
    %c0_i32_0 = arith.constant 0 : i32
    return %arg0, %c0_i32 : i32, i32
  }
  func.func @transform_9(%arg0: i32) -> (i32, i32) {
    %c0_i32 = arith.constant 0 : i32
    %c0_i32_0 = arith.constant 0 : i32
    return %arg0, %c0_i32 : i32, i32
  }
}

</mosaic_0001>

<llo_original>
// kernel: d2rl_policy_forward.1
$region0: #{d2rl_policy_forward.1}
  #allocation0 [shape = 'u32[]', space=smem, size = 0x4, offset = 0x4, fixed_abs, tag = 'smem constant byte address 0x4 - core index']
  #allocation1 [shape = 'u32[144,128]{1,0:T(1,128)}', space=vmem, size = 0x12000, scoped, tag = 'internal scratch']
  %s0 = inlined_call_operand.vmem [shape: f32[8,16], index: 0, kind: input, shape index: {}]
  %s1 = inlined_call_operand.hbm [shape: f32[16,32], index: 1, kind: input, shape index: {}]
  %s2 = inlined_call_operand.vmem [shape: f32[1,32], index: 2, kind: input, shape index: {}]
  %s3 = inlined_call_operand.vmem [shape: f32[32,32], index: 3, kind: input, shape index: {}]
  %s4 = inlined_call_operand.hbm [shape: f32[16,32], index: 4, kind: input, shape index: {}]
  %s5 = inlined_call_operand.hbm [shape: f32[1,32], index: 5, kind: input, shape index: {}]
  %s6 = inlined_call_operand.hbm [shape: f32[32,256], index: 6, kind: input, shape index: {}]
  %s7 = inlined_call_operand.vmem [shape: f32[1,256], index: 7, kind: input, shape index: {}]
  %s8 = inlined_call_operand.vmem [shape: f32[8,128], index: 8, kind: output, shape index: {0}]
  %s9 = inlined_call_operand.vmem [shape: f32[8,128], index: 9, kind: output, shape index: {1}]
  %10 = xla_tuple %s8, %s9
  %s11 = sld [smem:[#allocation0]]
  $region66: #{d2rl_policy_forward.1} parent=0
    _
  %s13 = ssub.s32 1, %s11
  %s14 = scalar_select 0, %s13, %s11
  $region1: #{d2rl_policy_forward.1} parent=0
    #allocation2 [shape = 'u8[8192]{0}', space=vmem, size = 0x2000, scoped, tag = 'input window, operand 1, single buffered']
    #allocation3 [shape = 's32[1]{0}', space=sflag, size = 0x4, scoped, tag = 'scoped memory for d2rl_policy_forward.1']
    #allocation4 [shape = 'u8[8192]{0}', space=vmem, size = 0x2000, scoped, tag = 'input window, operand 4, single buffered']
    #allocation5 [shape = 's32[1]{0}', space=sflag, size = 0x4, scoped, tag = 'scoped memory for d2rl_policy_forward.1']
    #allocation6 [shape = 'u8[512]{0}', space=vmem, size = 0x400, scoped, tag = 'input window, operand 5, single buffered']
    #allocation7 [shape = 'u8[32768]{0}', space=vmem, size = 0x8000, scoped, tag = 'input window, operand 6, single buffered']
    #allocation8 [shape = 's32[1]{0}', space=sflag, size = 0x4, scoped, tag = 'scoped memory for d2rl_policy_forward.1']
    %15 = vsyncpa [#allocation3], 0
    %16 = vsyncpa [#allocation5], 0
    %17 = vsyncpa [#allocation8], 0
    // Predicated region
    $region2: #{d2rl_policy_forward.1} parent=1 // pred_check
      _
    $region3: #{d2rl_policy_forward.1} parent=1 // pred_check_branch
      %19 = sbr.rel (0) target = $region5
    $region4: #{d2rl_policy_forward.1} parent=1 // pred_region
      _
    $region5: #{d2rl_policy_forward.1} parent=1 // pred_fallthru
      _
    // Predicated region
    $region6: #{d2rl_policy_forward.1} parent=1 // pred_check
      _
    $region7: #{d2rl_policy_forward.1} parent=1 // pred_check_branch
      %21 = sbr.rel (0) target = $region9
    $region8: #{d2rl_policy_forward.1} parent=1 // pred_region
      %s23 = ssub.s32 256, 256
      %24 = vsyncadd [#allocation3], %s23
      %s25 = sshll.u32 [#allocation2], 4
      %s26 = int_to_ptr.vmem [resolvable:$true] %s25
      %31 = dma.hbm_to_vmem [thread:$0]  %s1, 256, %s26, [#allocation3], 128, 128, 8
    $region9: #{d2rl_policy_forward.1} parent=1 // pred_fallthru
      _
    // Predicated region
    $region10: #{d2rl_policy_forward.1} parent=1 // pred_check
      _
    $region11: #{d2rl_policy_forward.1} parent=1 // pred_check_branch
      %33 = sbr.rel (0) target = $region13
    $region12: #{d2rl_policy_forward.1} parent=1 // pred_region
      _
    $region13: #{d2rl_policy_forward.1} parent=1 // pred_fallthru
      _
    // Predicated region
    $region14: #{d2rl_policy_forward.1} parent=1 // pred_check
      _
    $region15: #{d2rl_policy_forward.1} parent=1 // pred_check_branch
      %35 = sbr.rel (0) target = $region17
    $region16: #{d2rl_policy_forward.1} parent=1 // pred_region
      _
    $region17: #{d2rl_policy_forward.1} parent=1 // pred_fallthru
      _
    // Predicated region
    $region18: #{d2rl_policy_forward.1} parent=1 // pred_check
      _
    $region19: #{d2rl_policy_forward.1} parent=1 // pred_check_branch
      %37 = sbr.rel (0) target = $region21
    $region20: #{d2rl_policy_forward.1} parent=1 // pred_region
      %s39 = ssub.s32 256, 256
      %40 = vsyncadd [#allocation5], %s39
      %s41 = sshll.u32 [#allocation4], 4
      %s42 = int_to_ptr.vmem [resolvable:$true] %s41
      %47 = dma.hbm_to_vmem [thread:$0]  %s4, 256, %s42, [#allocation5], 128, 128, 8
    $region21: #{d2rl_policy_forward.1} parent=1 // pred_fallthru
      _
    // Predicated region
    $region22: #{d2rl_policy_forward.1} parent=1 // pred_check
      _
    $region23: #{d2rl_policy_forward.1} parent=1 // pred_check_branch
      %49 = sbr.rel (0) target = $region25
    $region24: #{d2rl_policy_forward.1} parent=1 // pred_region
      %s51 = ssub.s32 16, 16
      %52 = vsyncadd [#allocation5], %s51
      %s54 = sshll.u32 [#allocation6], 4
      %s55 = int_to_ptr.vmem [resolvable:$true] %s54
      %57 = dma.hbm_to_vmem [thread:$0]  %s5, 16, %s55, [#allocation5]
    $region25: #{d2rl_policy_forward.1} parent=1 // pred_fallthru
      _
    // Predicated region
    $region26: #{d2rl_policy_forward.1} parent=1 // pred_check
      _
    $region27: #{d2rl_policy_forward.1} parent=1 // pred_check_branch
      %59 = sbr.rel (0) target = $region29
    $region28: #{d2rl_policy_forward.1} parent=1 // pred_region
      %s61 = ssub.s32 1024, 1024
      %62 = vsyncadd [#allocation8], %s61
      %s63 = sshll.u32 [#allocation7], 4
      %s64 = int_to_ptr.vmem [resolvable:$true] %s63
      %69 = dma.hbm_to_vmem [thread:$0]  %s6, 1024, %s64, [#allocation8], 256, 256, 16
    $region29: #{d2rl_policy_forward.1} parent=1 // pred_fallthru
      _
    // Predicated region
    $region30: #{d2rl_policy_forward.1} parent=1 // pred_check
      _
    $region31: #{d2rl_policy_forward.1} parent=1 // pred_check_branch
      %71 = sbr.rel (0) target = $region33
    $region32: #{d2rl_policy_forward.1} parent=1 // pred_region
      _
    $region33: #{d2rl_policy_forward.1} parent=1 // pred_fallthru
      _
    // Predicated region
    $region34: #{d2rl_policy_forward.1} parent=1 // pred_check
      _
    $region35: #{d2rl_policy_forward.1} parent=1 // pred_check_branch
      %73 = sbr.rel (0) target = $region37
    $region36: #{d2rl_policy_forward.1} parent=1 // pred_region
      %74 = dma.done [#allocation3], 256
    $region37: #{d2rl_policy_forward.1} parent=1 // pred_fallthru
      _
    // Predicated region
    $region38: #{d2rl_policy_forward.1} parent=1 // pred_check
      _
    $region39: #{d2rl_policy_forward.1} parent=1 // pred_check_branch
      %76 = sbr.rel (0) target = $region41
    $region40: #{d2rl_policy_forward.1} parent=1 // pred_region
      %77 = dma.done [#allocation5], 256
    $region41: #{d2rl_policy_forward.1} parent=1 // pred_fallthru
      _
    // Predicated region
    $region42: #{d2rl_policy_forward.1} parent=1 // pred_check
      _
    $region43: #{d2rl_policy_forward.1} parent=1 // pred_check_branch
      %79 = sbr.rel (0) target = $region45
    $region44: #{d2rl_policy_forward.1} parent=1 // pred_region
      %80 = dma.done [#allocation5], 16
    $region45: #{d2rl_policy_forward.1} parent=1 // pred_fallthru
      _
    // Predicated region
    $region46: #{d2rl_policy_forward.1} parent=1 // pred_check
      _
    $region47: #{d2rl_policy_forward.1} parent=1 // pred_check_branch
      %82 = sbr.rel (0) target = $region49
    $region48: #{d2rl_policy_forward.1} parent=1 // pred_region
      %83 = dma.done [#allocation8], 1024
    $region49: #{d2rl_policy_forward.1} parent=1 // pred_fallthru
      _
    %v84 = vld [vmem:[#allocation2] sm:$0xff]
    %v85 = vld [vmem:[#allocation2 + $0x8] sm:$0xff]
    %v86 = vld [vmem:[%s2] sm:$0x1]
    %v87 = vld [vmem:[%s3] sm:$0xff]
    %v88 = vld [vmem:[%s3 + $0x8] sm:$0xff]
    %v89 = vld [vmem:[%s3 + $0x10] sm:$0xff]
    %v90 = vld [vmem:[%s3 + $0x18] sm:$0xff]
    %v91 = vld [vmem:[#allocation4] sm:$0xff]
    %v92 = vld [vmem:[#allocation4 + $0x8] sm:$0xff]
    %v93 = vld [vmem:[#allocation6] sm:$0x1]
    %v94 = vld [vmem:[#allocation7] sm:$0xff]
    %v95 = vld [vmem:[#allocation7 + $0x8] sm:$0xff]
    %v96 = vld [vmem:[#allocation7 + $0x10] sm:$0xff]
    %v97 = vld [vmem:[#allocation7 + $0x18] sm:$0xff]
    %v98 = vld [vmem:[#allocation7 + $0x20] sm:$0xff]
    %v99 = vld [vmem:[#allocation7 + $0x28] sm:$0xff]
    %v100 = vld [vmem:[#allocation7 + $0x30] sm:$0xff]
    %v101 = vld [vmem:[#allocation7 + $0x38] sm:$0xff]
    %v102 = vld [vmem:[%s7] sm:$0x3]
    %v103 = vld [vmem:[%s0] sm:$0xff]
    %v105 = vlaneseq
    %v106 = vshrl.u32 %v105, 7
    %v107 = vsub.s32 0, %v106
    %v108 = vrot.slane %v86, %v107
    %vm110 = vcmask 130048
    %v112 = vsel %vm110, %v103, 0
    %114 = vmatprep.subr.mxu0 0.0
    %115 = vmatpush1.msra.mxu0 %v84
    %116 = vmatprep.subr.mxu0 0.0
    %117 = vmatpush1.msra.mxu0 %v85
    %118 = vmatprep.subr.mxu0 0.0
    %119 = vmatpush1.msra.mxu0 0.0
    %120 = vmatprep.subr.mxu0 0.0
    %121 = vmatpush1.msra.mxu0 0.0
    %122 = vmatprep.subr.mxu0 0.0
    %123 = vmatpush1.msra.mxu0 0.0
    %124 = vmatprep.subr.mxu0 0.0
    %125 = vmatpush1.msra.mxu0 0.0
    %126 = vmatprep.subr.mxu0 0.0
    %127 = vmatpush1.msra.mxu0 0.0
    %128 = vmatprep.subr.mxu0 0.0
    %129 = vmatpush1.msra.mxu0 0.0
    %130 = vmatprep.subr.mxu0 0.0
    %131 = vmatpush1.msra.mxu0 0.0
    %132 = vmatprep.subr.mxu0 0.0
    %133 = vmatpush1.msra.mxu0 0.0
    %134 = vmatprep.subr.mxu0 0.0
    %135 = vmatpush1.msra.mxu0 0.0
    %136 = vmatprep.subr.mxu0 0.0
    %137 = vmatpush1.msra.mxu0 0.0
    %138 = vmatprep.subr.mxu0 0.0
    %139 = vmatpush1.msra.mxu0 0.0
    %140 = vmatprep.subr.mxu0 0.0
    %141 = vmatpush1.msra.mxu0 0.0
    %142 = vmatprep.subr.mxu0 0.0
    %143 = vmatpush1.msra.mxu0 0.0
    %144 = vmatprep.subr.mxu0 0.0
    %145 = vmatpush1.msra.mxu0 0.0
    %146 = vmatprep.subr.mxu0 0.0
    %147 = vmatpush1.msra.mxu0 0.0
    %148 = vmatprep.subr.mxu0 0.0
    %149 = vmatpush1.msra.mxu0 0.0
    %150 = vmatprep.subr.mxu0 0.0
    %151 = vmatpush1.msra.mxu0 0.0
    %152 = vmatprep.subr.mxu0 0.0
    %153 = vmatpush1.msra.mxu0 0.0
    %154 = vmatprep.subr.mxu0 0.0
    %155 = vmatpush1.msra.mxu0 0.0
    %156 = vmatprep.subr.mxu0 0.0
    %157 = vmatpush1.msra.mxu0 0.0
    %158 = vmatprep.subr.mxu0 0.0
    %159 = vmatpush1.msra.mxu0 0.0
    %160 = vmatprep.subr.mxu0 0.0
    %161 = vmatpush1.msra.mxu0 0.0
    %162 = vmatprep.subr.mxu0 0.0
    %163 = vmatpush1.msra.mxu0 0.0
    %164 = vmatprep.subr.mxu0 0.0
    %165 = vmatpush1.msra.mxu0 0.0
    %166 = vmatprep.subr.mxu0 0.0
    %167 = vmatpush1.msra.mxu0 0.0
    %168 = vmatprep.subr.mxu0 0.0
    %169 = vmatpush1.msra.mxu0 0.0
    %170 = vmatprep.subr.mxu0 0.0
    %171 = vmatpush1.msra.mxu0 0.0
    %172 = vmatprep.subr.mxu0 0.0
    %173 = vmatpush1.msra.mxu0 0.0
    %174 = vmatprep.subr.mxu0 0.0
    %175 = vmatpush1.msra.mxu0 0.0
    %176 = vmatprep.subr.mxu0 0.0
    %177 = vmatpush1.msra.mxu0 0.0
    %178 = vmatprep.mubr.f32.mxu0 0.0
    %179 = vmatmul.mubr.f32.gmra.mrb[0].mxu0 %v112
    %v180 = vpop.f32.mrb[0].mxu0
    %v181 = vadd.f32 %v108, %v180
    %v182 = vpop.f32.mrb[0].mxu0
    %183 = vdwg.mxu0
    %v184 = vxor.u32 %v181, 2147483648
    %v185 = vmul.f32 %v184, 1.442695
    %v186 = vpow.pop %v185
    %v187 = vadd.f32 %v186, 1.0
    %v188 = vrcp.pop %v187
    %v189 = vmul.f32 1.0, %v188
    %v190 = vmul.f32 %v181, %v189
    %191 = vmatprep.subr.mxu0 0.0
    %192 = vmatpush1.msra.mxu0 %v91
    %193 = vmatprep.subr.mxu0 0.0
    %194 = vmatpush1.msra.mxu0 %v92
    %195 = vmatprep.subr.mxu0 0.0
    %196 = vmatpush1.msra.mxu0 0.0
    %197 = vmatprep.subr.mxu0 0.0
    %198 = vmatpush1.msra.mxu0 0.0
    %199 = vmatprep.subr.mxu0 0.0
    %200 = vmatpush1.msra.mxu0 0.0
    %201 = vmatprep.subr.mxu0 0.0
    %202 = vmatpush1.msra.mxu0 0.0
    %203 = vmatprep.subr.mxu0 0.0
    %204 = vmatpush1.msra.mxu0 0.0
    %205 = vmatprep.subr.mxu0 0.0
    %206 = vmatpush1.msra.mxu0 0.0
    %207 = vmatprep.subr.mxu0 0.0
    %208 = vmatpush1.msra.mxu0 0.0
    %209 = vmatprep.subr.mxu0 0.0
    %210 = vmatpush1.msra.mxu0 0.0
    %211 = vmatprep.subr.mxu0 0.0
    %212 = vmatpush1.msra.mxu0 0.0
    %213 = vmatprep.subr.mxu0 0.0
    %214 = vmatpush1.msra.mxu0 0.0
    %215 = vmatprep.subr.mxu0 0.0
    %216 = vmatpush1.msra.mxu0 0.0
    %217 = vmatprep.subr.mxu0 0.0
    %218 = vmatpush1.msra.mxu0 0.0
    %219 = vmatprep.subr.mxu0 0.0
    %220 = vmatpush1.msra.mxu0 0.0
    %221 = vmatprep.subr.mxu0 0.0
    %222 = vmatpush1.msra.mxu0 0.0
    %223 = vmatprep.subr.mxu0 0.0
    %224 = vmatpush1.msra.mxu0 0.0
    %225 = vmatprep.subr.mxu0 0.0
    %226 = vmatpush1.msra.mxu0 0.0
    %227 = vmatprep.subr.mxu0 0.0
    %228 = vmatpush1.msra.mxu0 0.0
    %229 = vmatprep.subr.mxu0 0.0
    %230 = vmatpush1.msra.mxu0 0.0
    %231 = vmatprep.subr.mxu0 0.0
    %232 = vmatpush1.msra.mxu0 0.0
    %233 = vmatprep.subr.mxu0 0.0
    %234 = vmatpush1.msra.mxu0 0.0
    %235 = vmatprep.subr.mxu0 0.0
    %236 = vmatpush1.msra.mxu0 0.0
    %237 = vmatprep.subr.mxu0 0.0
    %238 = vmatpush1.msra.mxu0 0.0
    %239 = vmatprep.subr.mxu0 0.0
    %240 = vmatpush1.msra.mxu0 0.0
    %241 = vmatprep.subr.mxu0 0.0
    %242 = vmatpush1.msra.mxu0 0.0
    %243 = vmatprep.subr.mxu0 0.0
    %244 = vmatpush1.msra.mxu0 0.0
    %245 = vmatprep.subr.mxu0 0.0
    %246 = vmatpush1.msra.mxu0 0.0
    %247 = vmatprep.subr.mxu0 0.0
    %248 = vmatpush1.msra.mxu0 0.0
    %249 = vmatprep.subr.mxu0 0.0
    %250 = vmatpush1.msra.mxu0 0.0
    %251 = vmatprep.subr.mxu0 0.0
    %252 = vmatpush1.msra.mxu0 0.0
    %253 = vmatprep.subr.mxu0 0.0
    %254 = vmatpush1.msra.mxu0 0.0
    %255 = vmatprep.mubr.f32.mxu0 0.0
    %256 = vmatmul.mubr.f32.gmra.mrb[0].mxu0 %v112
    %v257 = vpop.f32.mrb[0].mxu0
    %v258 = vadd.f32 0.0, %v257
    %v259 = vpop.f32.mrb[0].mxu0
    %260 = vdwg.mxu0
    %vm261 = vcmask 261120
    %v263 = vsel %vm261, %v190, 0
    %265 = vmatprep.subr.mxu0 0.0
    %266 = vmatpush1.msra.mxu0 %v87
    %267 = vmatprep.subr.mxu0 0.0
    %268 = vmatpush1.msra.mxu0 %v88
    %269 = vmatprep.subr.mxu0 0.0
    %270 = vmatpush1.msra.mxu0 %v89
    %271 = vmatprep.subr.mxu0 0.0
    %272 = vmatpush1.msra.mxu0 %v90
    %273 = vmatprep.subr.mxu0 0.0
    %274 = vmatpush1.msra.mxu0 0.0
    %275 = vmatprep.subr.mxu0 0.0
    %276 = vmatpush1.msra.mxu0 0.0
    %277 = vmatprep.subr.mxu0 0.0
    %278 = vmatpush1.msra.mxu0 0.0
    %279 = vmatprep.subr.mxu0 0.0
    %280 = vmatpush1.msra.mxu0 0.0
    %281 = vmatprep.subr.mxu0 0.0
    %282 = vmatpush1.msra.mxu0 0.0
    %283 = vmatprep.subr.mxu0 0.0
    %284 = vmatpush1.msra.mxu0 0.0
    %285 = vmatprep.subr.mxu0 0.0
    %286 = vmatpush1.msra.mxu0 0.0
    %287 = vmatprep.subr.mxu0 0.0
    %288 = vmatpush1.msra.mxu0 0.0
    %289 = vmatprep.subr.mxu0 0.0
    %290 = vmatpush1.msra.mxu0 0.0
    %291 = vmatprep.subr.mxu0 0.0
    %292 = vmatpush1.msra.mxu0 0.0
    %293 = vmatprep.subr.mxu0 0.0
    %294 = vmatpush1.msra.mxu0 0.0
    %295 = vmatprep.subr.mxu0 0.0
    %296 = vmatpush1.msra.mxu0 0.0
    %297 = vmatprep.subr.mxu0 0.0
    %298 = vmatpush1.msra.mxu0 0.0
    %299 = vmatprep.subr.mxu0 0.0
    %300 = vmatpush1.msra.mxu0 0.0
    %301 = vmatprep.subr.mxu0 0.0
    %302 = vmatpush1.msra.mxu0 0.0
    %303 = vmatprep.subr.mxu0 0.0
    %304 = vmatpush1.msra.mxu0 0.0
    %305 = vmatprep.subr.mxu0 0.0
    %306 = vmatpush1.msra.mxu0 0.0
    %307 = vmatprep.subr.mxu0 0.0
    %308 = vmatpush1.msra.mxu0 0.0
    %309 = vmatprep.subr.mxu0 0.0
    %310 = vmatpush1.msra.mxu0 0.0
    %311 = vmatprep.subr.mxu0 0.0
    %312 = vmatpush1.msra.mxu0 0.0
    %313 = vmatprep.subr.mxu0 0.0
    %314 = vmatpush1.msra.mxu0 0.0
    %315 = vmatprep.subr.mxu0 0.0
    %316 = vmatpush1.msra.mxu0 0.0
    %317 = vmatprep.subr.mxu0 0.0
    %318 = vmatpush1.msra.mxu0 0.0
    %319 = vmatprep.subr.mxu0 0.0
    %320 = vmatpush1.msra.mxu0 0.0
    %321 = vmatprep.subr.mxu0 0.0
    %322 = vmatpush1.msra.mxu0 0.0
    %323 = vmatprep.subr.mxu0 0.0
    %324 = vmatpush1.msra.mxu0 0.0
    %325 = vmatprep.subr.mxu0 0.0
    %326 = vmatpush1.msra.mxu0 0.0
    %327 = vmatprep.subr.mxu0 0.0
    %328 = vmatpush1.msra.mxu0 0.0
    %329 = vmatprep.mubr.f32.mxu0 0.0
    %330 = vmatmul.mubr.f32.gmra.mrb[0].mxu0 %v263
    %v331 = vpop.f32.mrb[0].mxu0
    %v332 = vadd.f32 %v258, %v331
    %v333 = vpop.f32.mrb[0].mxu0
    %334 = vdwg.mxu0
    %v336 = vlaneseq
    %v337 = vshrl.u32 %v336, 7
    %v338 = vsub.s32 0, %v337
    %v339 = vrot.slane %v93, %v338
    %v341 = vadd.f32 %v332, %v339
    %v342 = vxor.u32 %v341, 2147483648
    %v343 = vmul.f32 %v342, 1.442695
    %v344 = vpow.pop %v343
    %v345 = vadd.f32 %v344, 1.0
    %v346 = vrcp.pop %v345
    %v347 = vmul.f32 1.0, %v346
    %v348 = vmul.f32 %v341, %v347
    %v350 = vlaneseq
    %v351 = vshrl.u32 %v350, 7
    %v352 = vsub.s32 0, %v351
    %v353 = vrot.slane %v102, %v352
    %v354 = vlaneseq
    %v355 = vshrl.u32 %v354, 7
    %v356 = vsub.s32 1, %v355
    %v357 = vrot.slane %v102, %v356
    %v361 = vsel %vm261, %v348, 0
    %363 = vmatprep.subr.mxu0 %v95
    %364 = vmatpush1.msra.mxu0 %v94
    %365 = vmatprep.subr.mxu0 %v97
    %366 = vmatpush1.msra.mxu0 %v96
    %367 = vmatprep.subr.mxu0 %v99
    %368 = vmatpush1.msra.mxu0 %v98
    %369 = vmatprep.subr.mxu0 %v101
    %370 = vmatpush1.msra.mxu0 %v100
    %371 = vmatprep.subr.mxu0 0.0
    %372 = vmatpush1.msra.mxu0 0.0
    %373 = vmatprep.subr.mxu0 0.0
    %374 = vmatpush1.msra.mxu0 0.0
    %375 = vmatprep.subr.mxu0 0.0
    %376 = vmatpush1.msra.mxu0 0.0
    %377 = vmatprep.subr.mxu0 0.0
    %378 = vmatpush1.msra.mxu0 0.0
    %379 = vmatprep.subr.mxu0 0.0
    %380 = vmatpush1.msra.mxu0 0.0
    %381 = vmatprep.subr.mxu0 0.0
    %382 = vmatpush1.msra.mxu0 0.0
    %383 = vmatprep.subr.mxu0 0.0
    %384 = vmatpush1.msra.mxu0 0.0
    %385 = vmatprep.subr.mxu0 0.0
    %386 = vmatpush1.msra.mxu0 0.0
    %387 = vmatprep.subr.mxu0 0.0
    %388 = vmatpush1.msra.mxu0 0.0
    %389 = vmatprep.subr.mxu0 0.0
    %390 = vmatpush1.msra.mxu0 0.0
    %391 = vmatprep.subr.mxu0 0.0
    %392 = vmatpush1.msra.mxu0 0.0
    %393 = vmatprep.subr.mxu0 0.0
    %394 = vmatpush1.msra.mxu0 0.0
    %395 = vmatprep.subr.mxu0 0.0
    %396 = vmatpush1.msra.mxu0 0.0
    %397 = vmatprep.subr.mxu0 0.0
    %398 = vmatpush1.msra.mxu0 0.0
    %399 = vmatprep.subr.mxu0 0.0
    %400 = vmatpush1.msra.mxu0 0.0
    %401 = vmatprep.subr.mxu0 0.0
    %402 = vmatpush1.msra.mxu0 0.0
    %403 = vmatprep.subr.mxu0 0.0
    %404 = vmatpush1.msra.mxu0 0.0
    %405 = vmatprep.subr.mxu0 0.0
    %406 = vmatpush1.msra.mxu0 0.0
    %407 = vmatprep.subr.mxu0 0.0
    %408 = vmatpush1.msra.mxu0 0.0
    %409 = vmatprep.subr.mxu0 0.0
    %410 = vmatpush1.msra.mxu0 0.0
    %411 = vmatprep.subr.mxu0 0.0
    %412 = vmatpush1.msra.mxu0 0.0
    %413 = vmatprep.subr.mxu0 0.0
    %414 = vmatpush1.msra.mxu0 0.0
    %415 = vmatprep.subr.mxu0 0.0
    %416 = vmatpush1.msra.mxu0 0.0
    %417 = vmatprep.subr.mxu0 0.0
    %418 = vmatpush1.msra.mxu0 0.0
    %419 = vmatprep.subr.mxu0 0.0
    %420 = vmatpush1.msra.mxu0 0.0
    %421 = vmatprep.subr.mxu0 0.0
    %422 = vmatpush1.msra.mxu0 0.0
    %423 = vmatprep.subr.mxu0 0.0
    %424 = vmatpush1.msra.mxu0 0.0
    %425 = vmatprep.subr.mxu0 0.0
    %426 = vmatpush1.msra.mxu0 0.0
    %427 = vmatprep.mubr.f32.mxu0 0.0
    %428 = vmatmul.mubr.f32.gmra.mrb[0].mxu0 %v361
    %v429 = vpop.f32.mrb[0].mxu0
    %v430 = vadd.f32 %v353, %v429
    %v431 = vpop.f32.mrb[0].mxu0
    %v432 = vadd.f32 %v357, %v431
    %433 = vdwg.mxu0
    %v434 = vmax.f32 %v430, -9.0
    %v435 = vmin.f32 %v434, 9.0
    %436 = vst [vmem:[%s8] sm:$0xff] %v435
    %v437 = vmax.f32 %v432, -5.0
    %v438 = vmin.f32 %v437, 2.0
    %v439 = vmul.f32 %v438, 1.442695
    %v440 = vpow.pop %v439
    %441 = vst [vmem:[%s9] sm:$0xff] %v440
    // Predicated region
    $region50: #{d2rl_policy_forward.1} parent=1 // pred_check
      _
    $region51: #{d2rl_policy_forward.1} parent=1 // pred_check_branch
      %443 = sbr.rel (0) target = $region53
    $region52: #{d2rl_policy_forward.1} parent=1 // pred_region
      _
    $region53: #{d2rl_policy_forward.1} parent=1 // pred_fallthru
      _
    // Predicated region
    $region54: #{d2rl_policy_forward.1} parent=1 // pred_check
      _
    $region55: #{d2rl_policy_forward.1} parent=1 // pred_check_branch
      %445 = sbr.rel (0) target = $region57
    $region56: #{d2rl_policy_forward.1} parent=1 // pred_region
      _
    $region57: #{d2rl_policy_forward.1} parent=1 // pred_fallthru
      _
    // Predicated region
    $region58: #{d2rl_policy_forward.1} parent=1 // pred_check
      _
    $region59: #{d2rl_policy_forward.1} parent=1 // pred_check_branch
      %447 = sbr.rel (0) target = $region61
    $region60: #{d2rl_policy_forward.1} parent=1 // pred_region
      _
    $region61: #{d2rl_policy_forward.1} parent=1 // pred_fallthru
      _
    // Predicated region
    $region62: #{d2rl_policy_forward.1} parent=1 // pred_check
      _
    $region63: #{d2rl_policy_forward.1} parent=1 // pred_check_branch
      %449 = sbr.rel (0) target = $region65
    $region64: #{d2rl_policy_forward.1} parent=1 // pred_region
      _
    $region65: #{d2rl_policy_forward.1} parent=1 // pred_fallthru
      _
    %450 = vsyncpa [#allocation3], 1
    %451 = vsyncpa [#allocation5], 1
    %452 = vsyncpa [#allocation8], 1

</llo_original>
